<compile_context>
chip_gen: v6e
topology: v6e:2x2x1
jax: 0.10.0
libtpu: 0.0.40
codegen_flags: <defaults>
</compile_context>

<pallas_src>
import numpy as np
import jax
import jax.numpy as jnp
from jax import lax
from jax.experimental import pallas as pl
from jax.experimental.pallas import tpu as pltpu

_OH, _OW = 7, 7


def _adaptive_pool_matrix(in_size: int, out_size: int) -> np.ndarray:
    """1-D adaptive-avg-pool as an (out_size, in_size) averaging matrix.

    Matches torch.nn.AdaptiveAvgPool semantics:
      start = floor(i * in / out),  end = ceil((i + 1) * in / out)
    """
    m = np.zeros((out_size, in_size), dtype=np.float32)
    for i in range(out_size):
        start = (i * in_size) // out_size
        end = -((-(i + 1) * in_size) // out_size)  # ceil division
        m[i, start:end] = 1.0 / float(end - start)
    return m


def _pick_channel_tile(C: int, H: int, W: int,
                       budget_bytes: int = 20 * 1024 * 1024) -> int:
    """Channel tile so double-buffered input + intermediates fit VMEM."""
    # per channel: 2x (double-buffered) HxW f32 input, the (H, 7)->128-lane
    # padded intermediate, plus slack for broadcasts / output buffers.
    per_channel = 2 * H * W * 4 + 512 * H + 16 * 1024
    tc = max(1, budget_bytes // per_channel)
    tc = int(min(tc, 256, C))
    if tc >= 8:
        tc = (tc // 8) * 8
    return tc


def _adaptive_pool_kernel(ph_ref, pw_ref, x_ref, o_ref):
    # ph_ref: (7, H)      H-pooling weights (tiny, resident)
    # pw_ref: (7, W)      W-pooling weights (tiny, resident)
    # x_ref : (TC, H, W)  channel tile
    # o_ref : (TC, 7, 7)  pooled tile (channels on the M/sublane side)
    tc = x_ref.shape[0]
    x = x_ref[...]
    pw_b = jnp.broadcast_to(pw_ref[...], (tc,) + pw_ref.shape)  # (TC, 7, W)
    ph_b = jnp.broadcast_to(ph_ref[...], (tc,) + ph_ref.shape)  # (TC, 7, H)

    # Pool along W: t1[c, h, j] = sum_w x[c, h, w] * Pw[j, w]
    t1 = lax.dot_general(
        x, pw_b,
        dimension_numbers=(((2,), (2,)), ((0,), (0,))),
        preferred_element_type=jnp.float32)                     # (TC, H, 7)

    # Pool along H: out[c, i, j] = sum_h Ph[i, h] * t1[c, h, j]
    out = lax.dot_general(
        ph_b, t1,
        dimension_numbers=(((2,), (1,)), ((0,), (0,))),
        preferred_element_type=jnp.float32)                     # (TC, 7, 7)

    o_ref[...] = out.astype(o_ref.dtype)


@jax.jit
def data_processor_forward(x: jax.Array) -> jax.Array:
    """Equivalent of DataProcessor.forward for x of shape (1, C, H, W)."""
    assert x.ndim == 4 and x.shape[0] == 1, "expects NCHW with N == 1"
    _, C, H, W = x.shape

    # Tiny pooling constants, baked at trace time (no per-call host upload).
    ph = jnp.asarray(_adaptive_pool_matrix(H, _OH))   # (7, H)
    pw = jnp.asarray(_adaptive_pool_matrix(W, _OW))   # (7, W)

    xf = x[0].astype(jnp.float32)                     # (C, H, W)

    tc = _pick_channel_tile(C, H, W)
    grid = (pl.cdiv(C, tc),)

    pooled = pl.pallas_call(
        _adaptive_pool_kernel,
        out_shape=jax.ShapeDtypeStruct((C, _OH, _OW), jnp.float32),
        grid=grid,
        in_specs=[
            pl.BlockSpec((_OH, H), lambda c: (0, 0)),       # Ph (resident)
            pl.BlockSpec((_OW, W), lambda c: (0, 0)),       # Pw (resident)
            pl.BlockSpec((tc, H, W), lambda c: (c, 0, 0)),  # channel tile
        ],
        out_specs=pl.BlockSpec((tc, _OH, _OW), lambda c: (c, 0, 0)),
        compiler_params=pltpu.CompilerParams(
            dimension_semantics=("parallel",),
            vmem_limit_bytes=32 * 1024 * 1024,
        ),
    )(ph, pw, xf)                                      # (C, 7, 7)

    # squeeze + permute(1, 2, 0) + view(-1, C): trivial XLA ops on tiny result.
    return jnp.transpose(pooled, (1, 2, 0)).reshape(_OH * _OW, C)


def _reference_forward(x: jax.Array) -> jax.Array:
    """Pure-JAX reference using the same adaptive-pool matrices."""
    _, C, H, W = x.shape
    ph = jnp.asarray(_adaptive_pool_matrix(H, _OH))
    pw = jnp.asarray(_adaptive_pool_matrix(W, _OW))
    pooled = jnp.einsum("ih,chw,jw->cij", ph, x[0].astype(jnp.float32), pw)
    return jnp.transpose(pooled, (1, 2, 0)).reshape(-1, C)


if __name__ == "__main__":
    key = jax.random.PRNGKey(0)
    x = jax.random.normal(key, (1, 4, 16, 16), dtype=jnp.float32)

    out = jax.block_until_ready(data_processor_forward(x))
    ref = jax.block_until_ready(_reference_forward(x))

    assert out.shape == (_OH * _OW, 4), out.shape
    assert jnp.allclose(out, ref, atol=1e-5, rtol=1e-5), "mismatch vs reference"

    print("KERNEL_OK")
</pallas_src>

<mosaic_0001>
module attributes {stable_mosaic.version = 11 : i64} {
  func.func @_adaptive_pool_kernel(%arg0: i32, %arg1: memref<7x16xf32, #tpu.memory_space<vmem>>, %arg2: memref<7x16xf32, #tpu.memory_space<vmem>>, %arg3: memref<4x16x16xf32, #tpu.memory_space<vmem>>, %arg4: memref<4x7x7xf32, #tpu.memory_space<vmem>>) attributes {dimension_semantics = [#tpu.dimension_semantics<parallel>], iteration_bounds = array<i64: 1>, scalar_prefetch = 0 : i64, scratch_operands = 0 : i64, tpu.core_type = #tpu.core_type<tc>, window_params = [{pipeline_mode = #tpu.pipeline_mode<synchronous>, transform_indices = @transform_0, window_bounds = array<i64: 7, 16>}, {pipeline_mode = #tpu.pipeline_mode<synchronous>, transform_indices = @transform_1, window_bounds = array<i64: 7, 16>}, {transform_indices = @transform_2, window_bounds = array<i64: 4, 16, 16>}, {transform_indices = @transform_3, window_bounds = array<i64: 4, 7, 7>}]} {
    %c0 = arith.constant 0 : index
    %c0_0 = arith.constant 0 : index
    %c0_1 = arith.constant 0 : index
    %0 = vector.load %arg3[%c0, %c0_0, %c0_1] : memref<4x16x16xf32, #tpu.memory_space<vmem>>, vector<4x16x16xf32>
    %c0_2 = arith.constant 0 : index
    %c0_3 = arith.constant 0 : index
    %1 = vector.load %arg2[%c0_2, %c0_3] : memref<7x16xf32, #tpu.memory_space<vmem>>, vector<7x16xf32>
    %2 = vector.shape_cast %1 : vector<7x16xf32> to vector<1x7x16xf32>
    %3 = vector.broadcast %2 : vector<1x7x16xf32> to vector<4x7x16xf32>
    %c0_4 = arith.constant 0 : index
    %c0_5 = arith.constant 0 : index
    %4 = vector.load %arg1[%c0_4, %c0_5] : memref<7x16xf32, #tpu.memory_space<vmem>>, vector<7x16xf32>
    %5 = vector.shape_cast %4 : vector<7x16xf32> to vector<1x7x16xf32>
    %6 = vector.broadcast %5 : vector<1x7x16xf32> to vector<4x7x16xf32>
    %cst = arith.constant dense<0.000000e+00> : vector<4x16x7xf32>
    %7 = tpu.matmul %0, %3, %cst {dimension_numbers = #tpu.dot_dimension_numbers<[2], [2], [1], [1], [0, 0, 0, 1, 1, 1], [0], [0]>} : vector<4x16x16xf32>, vector<4x7x16xf32>, vector<4x16x7xf32> -> vector<4x16x7xf32>
    %cst_6 = arith.constant dense<0.000000e+00> : vector<4x7x7xf32>
    %8 = tpu.matmul %6, %7, %cst_6 {dimension_numbers = #tpu.dot_dimension_numbers<[2], [1], [1], [2], [0, 0, 0, 1, 1, 2], [0], [0]>} : vector<4x7x16xf32>, vector<4x16x7xf32>, vector<4x7x7xf32> -> vector<4x7x7xf32>
    %c0_7 = arith.constant 0 : index
    %c0_8 = arith.constant 0 : index
    %c0_9 = arith.constant 0 : index
    %9 = vector.load %arg4[%c0_7, %c0_8, %c0_9] : memref<4x7x7xf32, #tpu.memory_space<vmem>>, vector<4x7x7xf32>
    tpu.vector_store %arg4[%c0_7, %c0_8, %c0_9], %8 {strides = array<i32>} : memref<4x7x7xf32, #tpu.memory_space<vmem>>, vector<4x7x7xf32>,
    return
  }
  func.func @transform_0(%arg0: i32) -> (i32, i32) {
    %c0_i32 = arith.constant 0 : i32
    %c0_i32_0 = arith.constant 0 : i32
    %c0_i32_1 = arith.constant 0 : i32
    return %c0_i32, %c0_i32_0 : i32, i32
  }
  func.func @transform_1(%arg0: i32) -> (i32, i32) {
    %c0_i32 = arith.constant 0 : i32
    %c0_i32_0 = arith.constant 0 : i32
    %c0_i32_1 = arith.constant 0 : i32
    return %c0_i32, %c0_i32_0 : i32, i32
  }
  func.func @transform_2(%arg0: i32) -> (i32, i32, i32) {
    %c0_i32 = arith.constant 0 : i32
    %c0_i32_0 = arith.constant 0 : i32
    %c0_i32_1 = arith.constant 0 : i32
    return %arg0, %c0_i32, %c0_i32_0 : i32, i32, i32
  }
  func.func @transform_3(%arg0: i32) -> (i32, i32, i32) {
    %c0_i32 = arith.constant 0 : i32
    %c0_i32_0 = arith.constant 0 : i32
    %c0_i32_1 = arith.constant 0 : i32
    return %arg0, %c0_i32, %c0_i32_0 : i32, i32, i32
  }
}

</mosaic_0001>

<llo_original>
// kernel: data_processor_forward.1
$region0: #{data_processor_forward.1}
  #allocation0 [shape = 'u32[]', space=smem, size = 0x4, offset = 0x4, fixed_abs, tag = 'smem constant byte address 0x4 - core index']
  #allocation1 [shape = 'u32[144,128]{1,0:T(1,128)}', space=vmem, size = 0x12000, scoped, tag = 'internal scratch']
  %s0 = inlined_call_operand.hbm [shape: f32[7,16], index: 0, kind: input, shape index: {}, may-alias: {0,1}]
  %s1 = inlined_call_operand.hbm [shape: f32[7,16], index: 1, kind: input, shape index: {}, may-alias: {0,1}]
  %s2 = inlined_call_operand.hbm [shape: f32[4,16,16], index: 2, kind: input, shape index: {}]
  %s3 = inlined_call_operand.vmem [shape: f32[4,7,7], index: 3, kind: output, shape index: {}]
  %s4 = sld [smem:[#allocation0]]
  $region34: #{data_processor_forward.1} parent=0
    _
  %s6 = ssub.s32 1, %s4
  %s7 = scalar_select 0, %s6, %s4
  $region1: #{data_processor_forward.1} parent=0
    #allocation2 [shape = 'u8[4096]{0}', space=vmem, size = 0x1000, scoped, tag = 'input window, operand 0, single buffered']
    #allocation3 [shape = 's32[1]{0}', space=sflag, size = 0x4, scoped, tag = 'scoped memory for data_processor_forward.1']
    #allocation4 [shape = 'u8[4096]{0}', space=vmem, size = 0x1000, scoped, tag = 'input window, operand 1, single buffered']
    #allocation5 [shape = 's32[1]{0}', space=sflag, size = 0x4, scoped, tag = 'scoped memory for data_processor_forward.1']
    #allocation6 [shape = 'u8[32768]{0}', space=vmem, size = 0x8000, scoped, tag = 'input window, operand 2, single buffered']
    %8 = vsyncpa [#allocation3], 0
    %9 = vsyncpa [#allocation5], 0
    // Predicated region
    $region2: #{data_processor_forward.1} parent=1 // pred_check
      _
    $region3: #{data_processor_forward.1} parent=1 // pred_check_branch
      %11 = sbr.rel (0) target = $region5
    $region4: #{data_processor_forward.1} parent=1 // pred_region
      %s13 = ssub.s32 128, 128
      %14 = vsyncadd [#allocation3], %s13
      %s16 = sshll.u32 [#allocation2], 4
      %s17 = int_to_ptr.vmem [resolvable:$true] %s16
      %19 = dma.hbm_to_vmem [thread:$0]  %s0, 128, %s17, [#allocation3]
    $region5: #{data_processor_forward.1} parent=1 // pred_fallthru
      _
    // Predicated region
    $region6: #{data_processor_forward.1} parent=1 // pred_check
      _
    $region7: #{data_processor_forward.1} parent=1 // pred_check_branch
      %21 = sbr.rel (0) target = $region9
    $region8: #{data_processor_forward.1} parent=1 // pred_region
      %s23 = ssub.s32 128, 128
      %24 = vsyncadd [#allocation5], %s23
      %s26 = sshll.u32 [#allocation4], 4
      %s27 = int_to_ptr.vmem [resolvable:$true] %s26
      %29 = dma.hbm_to_vmem [thread:$0]  %s1, 128, %s27, [#allocation5]
    $region9: #{data_processor_forward.1} parent=1 // pred_fallthru
      _
    // Predicated region
    $region10: #{data_processor_forward.1} parent=1 // pred_check
      _
    $region11: #{data_processor_forward.1} parent=1 // pred_check_branch
      %31 = sbr.rel (0) target = $region13
    $region12: #{data_processor_forward.1} parent=1 // pred_region
      %s33 = ssub.s32 1024, 1024
      %34 = vsyncadd [#allocation5], %s33
      %s35 = sshll.u32 [#allocation6], 4
      %s36 = int_to_ptr.vmem [resolvable:$true] %s35
      %41 = dma.hbm_to_vmem [thread:$0]  %s2, 1024, %s36, [#allocation5], 128, 128, 8
    $region13: #{data_processor_forward.1} parent=1 // pred_fallthru
      _
    // Predicated region
    $region14: #{data_processor_forward.1} parent=1 // pred_check
      _
    $region15: #{data_processor_forward.1} parent=1 // pred_check_branch
      %43 = sbr.rel (0) target = $region17
    $region16: #{data_processor_forward.1} parent=1 // pred_region
      %44 = dma.done [#allocation3], 128
    $region17: #{data_processor_forward.1} parent=1 // pred_fallthru
      _
    // Predicated region
    $region18: #{data_processor_forward.1} parent=1 // pred_check
      _
    $region19: #{data_processor_forward.1} parent=1 // pred_check_branch
      %46 = sbr.rel (0) target = $region21
    $region20: #{data_processor_forward.1} parent=1 // pred_region
      %47 = dma.done [#allocation5], 128
    $region21: #{data_processor_forward.1} parent=1 // pred_fallthru
      _
    // Predicated region
    $region22: #{data_processor_forward.1} parent=1 // pred_check
      _
    $region23: #{data_processor_forward.1} parent=1 // pred_check_branch
      %49 = sbr.rel (0) target = $region25
    $region24: #{data_processor_forward.1} parent=1 // pred_region
      %50 = dma.done [#allocation5], 1024
    $region25: #{data_processor_forward.1} parent=1 // pred_fallthru
      _
    %v51 = vld [vmem:[#allocation6] sm:$0xff]
    %v52 = vld [vmem:[#allocation6 + $0x8] sm:$0xff]
    %v53 = vld [vmem:[#allocation6 + $0x10] sm:$0xff]
    %v54 = vld [vmem:[#allocation6 + $0x18] sm:$0xff]
    %v55 = vld [vmem:[#allocation6 + $0x20] sm:$0xff]
    %v56 = vld [vmem:[#allocation6 + $0x28] sm:$0xff]
    %v57 = vld [vmem:[#allocation6 + $0x30] sm:$0xff]
    %v58 = vld [vmem:[#allocation6 + $0x38] sm:$0xff]
    %v59 = vld [vmem:[#allocation4] sm:$0x7f]
    %v60 = vld [vmem:[#allocation2] sm:$0x7f]
    %vm61 = vcmask 130048
    %v63 = vsel %vm61, %v51, 0
    %v66 = vsel %vm61, %v52, 0
    %v69 = vsel %vm61, %v59, 0
    %71 = vmatprep.subr.mxu0 0.0
    %72 = vmatpush1.xpose.msra.mxu0 0.0
    %73 = vmatprep.subr.mxu0 0.0
    %74 = vmatpush1.xpose.msra.mxu0 0.0
    %75 = vmatprep.subr.mxu0 0.0
    %76 = vmatpush1.xpose.msra.mxu0 0.0
    %77 = vmatprep.subr.mxu0 0.0
    %78 = vmatpush1.xpose.msra.mxu0 0.0
    %79 = vmatprep.subr.mxu0 0.0
    %80 = vmatpush1.xpose.msra.mxu0 0.0
    %81 = vmatprep.subr.mxu0 0.0
    %82 = vmatpush1.xpose.msra.mxu0 0.0
    %83 = vmatprep.subr.mxu0 0.0
    %84 = vmatpush1.xpose.msra.mxu0 0.0
    %85 = vmatprep.subr.mxu0 0.0
    %86 = vmatpush1.xpose.msra.mxu0 0.0
    %87 = vmatprep.subr.mxu0 0.0
    %88 = vmatpush1.xpose.msra.mxu0 0.0
    %89 = vmatprep.subr.mxu0 0.0
    %90 = vmatpush1.xpose.msra.mxu0 0.0
    %91 = vmatprep.subr.mxu0 0.0
    %92 = vmatpush1.xpose.msra.mxu0 0.0
    %93 = vmatprep.subr.mxu0 0.0
    %94 = vmatpush1.xpose.msra.mxu0 0.0
    %95 = vmatprep.subr.mxu0 0.0
    %96 = vmatpush1.xpose.msra.mxu0 0.0
    %97 = vmatprep.subr.mxu0 0.0
    %98 = vmatpush1.xpose.msra.mxu0 0.0
    %99 = vmatprep.subr.mxu0 0.0
    %100 = vmatpush1.xpose.msra.mxu0 0.0
    %101 = vmatprep.subr.mxu0 0.0
    %102 = vmatpush1.xpose.msra.mxu0 %v69
    %103 = vmatprep.subr.mxu0 0.0
    %104 = vmatpush2.xpose.msra.mxu0 0.0
    %105 = vmatprep.subr.mxu0 0.0
    %106 = vmatpush2.xpose.msra.mxu0 0.0
    %107 = vmatprep.subr.mxu0 0.0
    %108 = vmatpush2.xpose.msra.mxu0 0.0
    %109 = vmatprep.subr.mxu0 0.0
    %110 = vmatpush2.xpose.msra.mxu0 0.0
    %111 = vmatprep.subr.mxu0 0.0
    %112 = vmatpush2.xpose.msra.mxu0 0.0
    %113 = vmatprep.subr.mxu0 0.0
    %114 = vmatpush2.xpose.msra.mxu0 0.0
    %115 = vmatprep.subr.mxu0 0.0
    %116 = vmatpush2.xpose.msra.mxu0 0.0
    %117 = vmatprep.subr.mxu0 0.0
    %118 = vmatpush2.xpose.msra.mxu0 0.0
    %119 = vmatprep.subr.mxu0 0.0
    %120 = vmatpush2.xpose.msra.mxu0 0.0
    %121 = vmatprep.subr.mxu0 0.0
    %122 = vmatpush2.xpose.msra.mxu0 0.0
    %123 = vmatprep.subr.mxu0 0.0
    %124 = vmatpush2.xpose.msra.mxu0 0.0
    %125 = vmatprep.subr.mxu0 0.0
    %126 = vmatpush2.xpose.msra.mxu0 0.0
    %127 = vmatprep.subr.mxu0 0.0
    %128 = vmatpush2.xpose.msra.mxu0 0.0
    %129 = vmatprep.subr.mxu0 0.0
    %130 = vmatpush2.xpose.msra.mxu0 0.0
    %131 = vmatprep.subr.mxu0 0.0
    %132 = vmatpush2.xpose.msra.mxu0 0.0
    %133 = vmatprep.subr.mxu0 0.0
    %134 = vmatpush2.xpose.msra.mxu0 0.0
    %135 = vmatprep.mubr.f32.mxu0 0.0
    %136 = vmatmul.mubr.f32.gmra.mxu0 %v63
    %v137 = vpop.f32.mrf.mxu0
    %v138 = vadd.f32 0.0, %v137
    %v139 = vpop.f32.mrf.mxu0
    %140 = vmatprep.mubr.f32.mxu0 0.0
    %141 = vmatmul.mubr.f32.gmra.mxu0 %v66
    %v142 = vpop.f32.mrf.mxu0
    %v143 = vadd.f32 0.0, %v142
    %v144 = vpop.f32.mrf.mxu0
    %145 = vdwg.mxu0
    %v147 = vsel %vm61, %v53, 0
    %v150 = vsel %vm61, %v54, 0
    %152 = vmatprep.subr.mxu0 0.0
    %153 = vmatpush1.xpose.msra.mxu0 0.0
    %154 = vmatprep.subr.mxu0 0.0
    %155 = vmatpush1.xpose.msra.mxu0 0.0
    %156 = vmatprep.subr.mxu0 0.0
    %157 = vmatpush1.xpose.msra.mxu0 0.0
    %158 = vmatprep.subr.mxu0 0.0
    %159 = vmatpush1.xpose.msra.mxu0 0.0
    %160 = vmatprep.subr.mxu0 0.0
    %161 = vmatpush1.xpose.msra.mxu0 0.0
    %162 = vmatprep.subr.mxu0 0.0
    %163 = vmatpush1.xpose.msra.mxu0 0.0
    %164 = vmatprep.subr.mxu0 0.0
    %165 = vmatpush1.xpose.msra.mxu0 0.0
    %166 = vmatprep.subr.mxu0 0.0
    %167 = vmatpush1.xpose.msra.mxu0 0.0
    %168 = vmatprep.subr.mxu0 0.0
    %169 = vmatpush1.xpose.msra.mxu0 0.0
    %170 = vmatprep.subr.mxu0 0.0
    %171 = vmatpush1.xpose.msra.mxu0 0.0
    %172 = vmatprep.subr.mxu0 0.0
    %173 = vmatpush1.xpose.msra.mxu0 0.0
    %174 = vmatprep.subr.mxu0 0.0
    %175 = vmatpush1.xpose.msra.mxu0 0.0
    %176 = vmatprep.subr.mxu0 0.0
    %177 = vmatpush1.xpose.msra.mxu0 0.0
    %178 = vmatprep.subr.mxu0 0.0
    %179 = vmatpush1.xpose.msra.mxu0 0.0
    %180 = vmatprep.subr.mxu0 0.0
    %181 = vmatpush1.xpose.msra.mxu0 0.0
    %182 = vmatprep.subr.mxu0 0.0
    %183 = vmatpush1.xpose.msra.mxu0 %v69
    %184 = vmatprep.subr.mxu0 0.0
    %185 = vmatpush2.xpose.msra.mxu0 0.0
    %186 = vmatprep.subr.mxu0 0.0
    %187 = vmatpush2.xpose.msra.mxu0 0.0
    %188 = vmatprep.subr.mxu0 0.0
    %189 = vmatpush2.xpose.msra.mxu0 0.0
    %190 = vmatprep.subr.mxu0 0.0
    %191 = vmatpush2.xpose.msra.mxu0 0.0
    %192 = vmatprep.subr.mxu0 0.0
    %193 = vmatpush2.xpose.msra.mxu0 0.0
    %194 = vmatprep.subr.mxu0 0.0
    %195 = vmatpush2.xpose.msra.mxu0 0.0
    %196 = vmatprep.subr.mxu0 0.0
    %197 = vmatpush2.xpose.msra.mxu0 0.0
    %198 = vmatprep.subr.mxu0 0.0
    %199 = vmatpush2.xpose.msra.mxu0 0.0
    %200 = vmatprep.subr.mxu0 0.0
    %201 = vmatpush2.xpose.msra.mxu0 0.0
    %202 = vmatprep.subr.mxu0 0.0
    %203 = vmatpush2.xpose.msra.mxu0 0.0
    %204 = vmatprep.subr.mxu0 0.0
    %205 = vmatpush2.xpose.msra.mxu0 0.0
    %206 = vmatprep.subr.mxu0 0.0
    %207 = vmatpush2.xpose.msra.mxu0 0.0
    %208 = vmatprep.subr.mxu0 0.0
    %209 = vmatpush2.xpose.msra.mxu0 0.0
    %210 = vmatprep.subr.mxu0 0.0
    %211 = vmatpush2.xpose.msra.mxu0 0.0
    %212 = vmatprep.subr.mxu0 0.0
    %213 = vmatpush2.xpose.msra.mxu0 0.0
    %214 = vmatprep.subr.mxu0 0.0
    %215 = vmatpush2.xpose.msra.mxu0 0.0
    %216 = vmatprep.mubr.f32.mxu0 0.0
    %217 = vmatmul.mubr.f32.gmra.mxu0 %v147
    %v218 = vpop.f32.mrf.mxu0
    %v219 = vadd.f32 0.0, %v218
    %v220 = vpop.f32.mrf.mxu0
    %221 = vmatprep.mubr.f32.mxu0 0.0
    %222 = vmatmul.mubr.f32.gmra.mxu0 %v150
    %v223 = vpop.f32.mrf.mxu0
    %v224 = vadd.f32 0.0, %v223
    %v225 = vpop.f32.mrf.mxu0
    %226 = vdwg.mxu0
    %v228 = vsel %vm61, %v55, 0
    %v231 = vsel %vm61, %v56, 0
    %233 = vmatprep.subr.mxu0 0.0
    %234 = vmatpush1.xpose.msra.mxu0 0.0
    %235 = vmatprep.subr.mxu0 0.0
    %236 = vmatpush1.xpose.msra.mxu0 0.0
    %237 = vmatprep.subr.mxu0 0.0
    %238 = vmatpush1.xpose.msra.mxu0 0.0
    %239 = vmatprep.subr.mxu0 0.0
    %240 = vmatpush1.xpose.msra.mxu0 0.0
    %241 = vmatprep.subr.mxu0 0.0
    %242 = vmatpush1.xpose.msra.mxu0 0.0
    %243 = vmatprep.subr.mxu0 0.0
    %244 = vmatpush1.xpose.msra.mxu0 0.0
    %245 = vmatprep.subr.mxu0 0.0
    %246 = vmatpush1.xpose.msra.mxu0 0.0
    %247 = vmatprep.subr.mxu0 0.0
    %248 = vmatpush1.xpose.msra.mxu0 0.0
    %249 = vmatprep.subr.mxu0 0.0
    %250 = vmatpush1.xpose.msra.mxu0 0.0
    %251 = vmatprep.subr.mxu0 0.0
    %252 = vmatpush1.xpose.msra.mxu0 0.0
    %253 = vmatprep.subr.mxu0 0.0
    %254 = vmatpush1.xpose.msra.mxu0 0.0
    %255 = vmatprep.subr.mxu0 0.0
    %256 = vmatpush1.xpose.msra.mxu0 0.0
    %257 = vmatprep.subr.mxu0 0.0
    %258 = vmatpush1.xpose.msra.mxu0 0.0
    %259 = vmatprep.subr.mxu0 0.0
    %260 = vmatpush1.xpose.msra.mxu0 0.0
    %261 = vmatprep.subr.mxu0 0.0
    %262 = vmatpush1.xpose.msra.mxu0 0.0
    %263 = vmatprep.subr.mxu0 0.0
    %264 = vmatpush1.xpose.msra.mxu0 %v69
    %265 = vmatprep.subr.mxu0 0.0
    %266 = vmatpush2.xpose.msra.mxu0 0.0
    %267 = vmatprep.subr.mxu0 0.0
    %268 = vmatpush2.xpose.msra.mxu0 0.0
    %269 = vmatprep.subr.mxu0 0.0
    %270 = vmatpush2.xpose.msra.mxu0 0.0
    %271 = vmatprep.subr.mxu0 0.0
    %272 = vmatpush2.xpose.msra.mxu0 0.0
    %273 = vmatprep.subr.mxu0 0.0
    %274 = vmatpush2.xpose.msra.mxu0 0.0
    %275 = vmatprep.subr.mxu0 0.0
    %276 = vmatpush2.xpose.msra.mxu0 0.0
    %277 = vmatprep.subr.mxu0 0.0
    %278 = vmatpush2.xpose.msra.mxu0 0.0
    %279 = vmatprep.subr.mxu0 0.0
    %280 = vmatpush2.xpose.msra.mxu0 0.0
    %281 = vmatprep.subr.mxu0 0.0
    %282 = vmatpush2.xpose.msra.mxu0 0.0
    %283 = vmatprep.subr.mxu0 0.0
    %284 = vmatpush2.xpose.msra.mxu0 0.0
    %285 = vmatprep.subr.mxu0 0.0
    %286 = vmatpush2.xpose.msra.mxu0 0.0
    %287 = vmatprep.subr.mxu0 0.0
    %288 = vmatpush2.xpose.msra.mxu0 0.0
    %289 = vmatprep.subr.mxu0 0.0
    %290 = vmatpush2.xpose.msra.mxu0 0.0
    %291 = vmatprep.subr.mxu0 0.0
    %292 = vmatpush2.xpose.msra.mxu0 0.0
    %293 = vmatprep.subr.mxu0 0.0
    %294 = vmatpush2.xpose.msra.mxu0 0.0
    %295 = vmatprep.subr.mxu0 0.0
    %296 = vmatpush2.xpose.msra.mxu0 0.0
    %297 = vmatprep.mubr.f32.mxu0 0.0
    %298 = vmatmul.mubr.f32.gmra.mxu0 %v228
    %v299 = vpop.f32.mrf.mxu0
    %v300 = vadd.f32 0.0, %v299
    %v301 = vpop.f32.mrf.mxu0
    %302 = vmatprep.mubr.f32.mxu0 0.0
    %303 = vmatmul.mubr.f32.gmra.mxu0 %v231
    %v304 = vpop.f32.mrf.mxu0
    %v305 = vadd.f32 0.0, %v304
    %v306 = vpop.f32.mrf.mxu0
    %307 = vdwg.mxu0
    %v309 = vsel %vm61, %v57, 0
    %v312 = vsel %vm61, %v58, 0
    %314 = vmatprep.subr.mxu0 0.0
    %315 = vmatpush1.xpose.msra.mxu0 0.0
    %316 = vmatprep.subr.mxu0 0.0
    %317 = vmatpush1.xpose.msra.mxu0 0.0
    %318 = vmatprep.subr.mxu0 0.0
    %319 = vmatpush1.xpose.msra.mxu0 0.0
    %320 = vmatprep.subr.mxu0 0.0
    %321 = vmatpush1.xpose.msra.mxu0 0.0
    %322 = vmatprep.subr.mxu0 0.0
    %323 = vmatpush1.xpose.msra.mxu0 0.0
    %324 = vmatprep.subr.mxu0 0.0
    %325 = vmatpush1.xpose.msra.mxu0 0.0
    %326 = vmatprep.subr.mxu0 0.0
    %327 = vmatpush1.xpose.msra.mxu0 0.0
    %328 = vmatprep.subr.mxu0 0.0
    %329 = vmatpush1.xpose.msra.mxu0 0.0
    %330 = vmatprep.subr.mxu0 0.0
    %331 = vmatpush1.xpose.msra.mxu0 0.0
    %332 = vmatprep.subr.mxu0 0.0
    %333 = vmatpush1.xpose.msra.mxu0 0.0
    %334 = vmatprep.subr.mxu0 0.0
    %335 = vmatpush1.xpose.msra.mxu0 0.0
    %336 = vmatprep.subr.mxu0 0.0
    %337 = vmatpush1.xpose.msra.mxu0 0.0
    %338 = vmatprep.subr.mxu0 0.0
    %339 = vmatpush1.xpose.msra.mxu0 0.0
    %340 = vmatprep.subr.mxu0 0.0
    %341 = vmatpush1.xpose.msra.mxu0 0.0
    %342 = vmatprep.subr.mxu0 0.0
    %343 = vmatpush1.xpose.msra.mxu0 0.0
    %344 = vmatprep.subr.mxu0 0.0
    %345 = vmatpush1.xpose.msra.mxu0 %v69
    %346 = vmatprep.subr.mxu0 0.0
    %347 = vmatpush2.xpose.msra.mxu0 0.0
    %348 = vmatprep.subr.mxu0 0.0
    %349 = vmatpush2.xpose.msra.mxu0 0.0
    %350 = vmatprep.subr.mxu0 0.0
    %351 = vmatpush2.xpose.msra.mxu0 0.0
    %352 = vmatprep.subr.mxu0 0.0
    %353 = vmatpush2.xpose.msra.mxu0 0.0
    %354 = vmatprep.subr.mxu0 0.0
    %355 = vmatpush2.xpose.msra.mxu0 0.0
    %356 = vmatprep.subr.mxu0 0.0
    %357 = vmatpush2.xpose.msra.mxu0 0.0
    %358 = vmatprep.subr.mxu0 0.0
    %359 = vmatpush2.xpose.msra.mxu0 0.0
    %360 = vmatprep.subr.mxu0 0.0
    %361 = vmatpush2.xpose.msra.mxu0 0.0
    %362 = vmatprep.subr.mxu0 0.0
    %363 = vmatpush2.xpose.msra.mxu0 0.0
    %364 = vmatprep.subr.mxu0 0.0
    %365 = vmatpush2.xpose.msra.mxu0 0.0
    %366 = vmatprep.subr.mxu0 0.0
    %367 = vmatpush2.xpose.msra.mxu0 0.0
    %368 = vmatprep.subr.mxu0 0.0
    %369 = vmatpush2.xpose.msra.mxu0 0.0
    %370 = vmatprep.subr.mxu0 0.0
    %371 = vmatpush2.xpose.msra.mxu0 0.0
    %372 = vmatprep.subr.mxu0 0.0
    %373 = vmatpush2.xpose.msra.mxu0 0.0
    %374 = vmatprep.subr.mxu0 0.0
    %375 = vmatpush2.xpose.msra.mxu0 0.0
    %376 = vmatprep.subr.mxu0 0.0
    %377 = vmatpush2.xpose.msra.mxu0 0.0
    %378 = vmatprep.mubr.f32.mxu0 0.0
    %379 = vmatmul.mubr.f32.gmra.mxu0 %v309
    %v380 = vpop.f32.mrf.mxu0
    %v381 = vadd.f32 0.0, %v380
    %v382 = vpop.f32.mrf.mxu0
    %383 = vmatprep.mubr.f32.mxu0 0.0
    %384 = vmatmul.mubr.f32.gmra.mxu0 %v312
    %v385 = vpop.f32.mrf.mxu0
    %v386 = vadd.f32 0.0, %v385
    %v387 = vpop.f32.mrf.mxu0
    %388 = vdwg.mxu0
    %v390 = vsel %vm61, %v60, 0
    %392 = vmatprep.subr.mxu0 0.0
    %393 = vmatpush1.msra.mxu0 0.0
    %394 = vmatprep.subr.mxu0 0.0
    %395 = vmatpush1.msra.mxu0 0.0
    %396 = vmatprep.subr.mxu0 0.0
    %397 = vmatpush1.msra.mxu0 0.0
    %398 = vmatprep.subr.mxu0 0.0
    %399 = vmatpush1.msra.mxu0 0.0
    %400 = vmatprep.subr.mxu0 0.0
    %401 = vmatpush1.msra.mxu0 0.0
    %402 = vmatprep.subr.mxu0 0.0
    %403 = vmatpush1.msra.mxu0 0.0
    %404 = vmatprep.subr.mxu0 0.0
    %405 = vmatpush1.msra.mxu0 0.0
    %406 = vmatprep.subr.mxu0 0.0
    %407 = vmatpush1.msra.mxu0 0.0
    %408 = vmatprep.subr.mxu0 0.0
    %409 = vmatpush1.msra.mxu0 0.0
    %410 = vmatprep.subr.mxu0 0.0
    %411 = vmatpush1.msra.mxu0 0.0
    %412 = vmatprep.subr.mxu0 0.0
    %413 = vmatpush1.msra.mxu0 0.0
    %414 = vmatprep.subr.mxu0 0.0
    %415 = vmatpush1.msra.mxu0 0.0
    %416 = vmatprep.subr.mxu0 0.0
    %417 = vmatpush1.msra.mxu0 0.0
    %418 = vmatprep.subr.mxu0 0.0
    %419 = vmatpush1.msra.mxu0 0.0
    %420 = vmatprep.subr.mxu0 0.0
    %421 = vmatpush1.msra.mxu0 %v143
    %422 = vmatprep.subr.mxu0 0.0
    %423 = vmatpush1.msra.mxu0 %v138
    %424 = vmatprep.subr.mxu0 0.0
    %425 = vmatpush2.msra.mxu0 0.0
    %426 = vmatprep.subr.mxu0 0.0
    %427 = vmatpush2.msra.mxu0 0.0
    %428 = vmatprep.subr.mxu0 0.0
    %429 = vmatpush2.msra.mxu0 0.0
    %430 = vmatprep.subr.mxu0 0.0
    %431 = vmatpush2.msra.mxu0 0.0
    %432 = vmatprep.subr.mxu0 0.0
    %433 = vmatpush2.msra.mxu0 0.0
    %434 = vmatprep.subr.mxu0 0.0
    %435 = vmatpush2.msra.mxu0 0.0
    %436 = vmatprep.subr.mxu0 0.0
    %437 = vmatpush2.msra.mxu0 0.0
    %438 = vmatprep.subr.mxu0 0.0
    %439 = vmatpush2.msra.mxu0 0.0
    %440 = vmatprep.subr.mxu0 0.0
    %441 = vmatpush2.msra.mxu0 0.0
    %442 = vmatprep.subr.mxu0 0.0
    %443 = vmatpush2.msra.mxu0 0.0
    %444 = vmatprep.subr.mxu0 0.0
    %445 = vmatpush2.msra.mxu0 0.0
    %446 = vmatprep.subr.mxu0 0.0
    %447 = vmatpush2.msra.mxu0 0.0
    %448 = vmatprep.subr.mxu0 0.0
    %449 = vmatpush2.msra.mxu0 0.0
    %450 = vmatprep.subr.mxu0 0.0
    %451 = vmatpush2.msra.mxu0 0.0
    %452 = vmatprep.subr.mxu0 0.0
    %453 = vmatpush2.msra.mxu0 0.0
    %454 = vmatprep.subr.mxu0 0.0
    %455 = vmatpush2.msra.mxu0 0.0
    %456 = vmatprep.mubr.f32.mxu0 0.0
    %457 = vmatmul.mubr.f32.gmra.mxu0 %v390
    %v458 = vpop.f32.mrf.mxu0
    %v459 = vadd.f32 0.0, %v458
    %v460 = vpop.f32.mrf.mxu0
    %461 = vdwg.mxu0
    %462 = vmatprep.subr.mxu0 0.0
    %463 = vmatpush1.msra.mxu0 0.0
    %464 = vmatprep.subr.mxu0 0.0
    %465 = vmatpush1.msra.mxu0 0.0
    %466 = vmatprep.subr.mxu0 0.0
    %467 = vmatpush1.msra.mxu0 0.0
    %468 = vmatprep.subr.mxu0 0.0
    %469 = vmatpush1.msra.mxu0 0.0
    %470 = vmatprep.subr.mxu0 0.0
    %471 = vmatpush1.msra.mxu0 0.0
    %472 = vmatprep.subr.mxu0 0.0
    %473 = vmatpush1.msra.mxu0 0.0
    %474 = vmatprep.subr.mxu0 0.0
    %475 = vmatpush1.msra.mxu0 0.0
    %476 = vmatprep.subr.mxu0 0.0
    %477 = vmatpush1.msra.mxu0 0.0
    %478 = vmatprep.subr.mxu0 0.0
    %479 = vmatpush1.msra.mxu0 0.0
    %480 = vmatprep.subr.mxu0 0.0
    %481 = vmatpush1.msra.mxu0 0.0
    %482 = vmatprep.subr.mxu0 0.0
    %483 = vmatpush1.msra.mxu0 0.0
    %484 = vmatprep.subr.mxu0 0.0
    %485 = vmatpush1.msra.mxu0 0.0
    %486 = vmatprep.subr.mxu0 0.0
    %487 = vmatpush1.msra.mxu0 0.0
    %488 = vmatprep.subr.mxu0 0.0
    %489 = vmatpush1.msra.mxu0 0.0
    %490 = vmatprep.subr.mxu0 0.0
    %491 = vmatpush1.msra.mxu0 %v224
    %492 = vmatprep.subr.mxu0 0.0
    %493 = vmatpush1.msra.mxu0 %v219
    %494 = vmatprep.subr.mxu0 0.0
    %495 = vmatpush2.msra.mxu0 0.0
    %496 = vmatprep.subr.mxu0 0.0
    %497 = vmatpush2.msra.mxu0 0.0
    %498 = vmatprep.subr.mxu0 0.0
    %499 = vmatpush2.msra.mxu0 0.0
    %500 = vmatprep.subr.mxu0 0.0
    %501 = vmatpush2.msra.mxu0 0.0
    %502 = vmatprep.subr.mxu0 0.0
    %503 = vmatpush2.msra.mxu0 0.0
    %504 = vmatprep.subr.mxu0 0.0
    %505 = vmatpush2.msra.mxu0 0.0
    %506 = vmatprep.subr.mxu0 0.0
    %507 = vmatpush2.msra.mxu0 0.0
    %508 = vmatprep.subr.mxu0 0.0
    %509 = vmatpush2.msra.mxu0 0.0
    %510 = vmatprep.subr.mxu0 0.0
    %511 = vmatpush2.msra.mxu0 0.0
    %512 = vmatprep.subr.mxu0 0.0
    %513 = vmatpush2.msra.mxu0 0.0
    %514 = vmatprep.subr.mxu0 0.0
    %515 = vmatpush2.msra.mxu0 0.0
    %516 = vmatprep.subr.mxu0 0.0
    %517 = vmatpush2.msra.mxu0 0.0
    %518 = vmatprep.subr.mxu0 0.0
    %519 = vmatpush2.msra.mxu0 0.0
    %520 = vmatprep.subr.mxu0 0.0
    %521 = vmatpush2.msra.mxu0 0.0
    %522 = vmatprep.subr.mxu0 0.0
    %523 = vmatpush2.msra.mxu0 0.0
    %524 = vmatprep.subr.mxu0 0.0
    %525 = vmatpush2.msra.mxu0 0.0
    %526 = vmatprep.mubr.f32.mxu0 0.0
    %527 = vmatmul.mubr.f32.gmra.mxu0 %v390
    %v528 = vpop.f32.mrf.mxu0
    %v529 = vadd.f32 0.0, %v528
    %v530 = vpop.f32.mrf.mxu0
    %531 = vdwg.mxu0
    %532 = vmatprep.subr.mxu0 0.0
    %533 = vmatpush1.msra.mxu0 0.0
    %534 = vmatprep.subr.mxu0 0.0
    %535 = vmatpush1.msra.mxu0 0.0
    %536 = vmatprep.subr.mxu0 0.0
    %537 = vmatpush1.msra.mxu0 0.0
    %538 = vmatprep.subr.mxu0 0.0
    %539 = vmatpush1.msra.mxu0 0.0
    %540 = vmatprep.subr.mxu0 0.0
    %541 = vmatpush1.msra.mxu0 0.0
    %542 = vmatprep.subr.mxu0 0.0
    %543 = vmatpush1.msra.mxu0 0.0
    %544 = vmatprep.subr.mxu0 0.0
    %545 = vmatpush1.msra.mxu0 0.0
    %546 = vmatprep.subr.mxu0 0.0
    %547 = vmatpush1.msra.mxu0 0.0
    %548 = vmatprep.subr.mxu0 0.0
    %549 = vmatpush1.msra.mxu0 0.0
    %550 = vmatprep.subr.mxu0 0.0
    %551 = vmatpush1.msra.mxu0 0.0
    %552 = vmatprep.subr.mxu0 0.0
    %553 = vmatpush1.msra.mxu0 0.0
    %554 = vmatprep.subr.mxu0 0.0
    %555 = vmatpush1.msra.mxu0 0.0
    %556 = vmatprep.subr.mxu0 0.0
    %557 = vmatpush1.msra.mxu0 0.0
    %558 = vmatprep.subr.mxu0 0.0
    %559 = vmatpush1.msra.mxu0 0.0
    %560 = vmatprep.subr.mxu0 0.0
    %561 = vmatpush1.msra.mxu0 %v305
    %562 = vmatprep.subr.mxu0 0.0
    %563 = vmatpush1.msra.mxu0 %v300
    %564 = vmatprep.subr.mxu0 0.0
    %565 = vmatpush2.msra.mxu0 0.0
    %566 = vmatprep.subr.mxu0 0.0
    %567 = vmatpush2.msra.mxu0 0.0
    %568 = vmatprep.subr.mxu0 0.0
    %569 = vmatpush2.msra.mxu0 0.0
    %570 = vmatprep.subr.mxu0 0.0
    %571 = vmatpush2.msra.mxu0 0.0
    %572 = vmatprep.subr.mxu0 0.0
    %573 = vmatpush2.msra.mxu0 0.0
    %574 = vmatprep.subr.mxu0 0.0
    %575 = vmatpush2.msra.mxu0 0.0
    %576 = vmatprep.subr.mxu0 0.0
    %577 = vmatpush2.msra.mxu0 0.0
    %578 = vmatprep.subr.mxu0 0.0
    %579 = vmatpush2.msra.mxu0 0.0
    %580 = vmatprep.subr.mxu0 0.0
    %581 = vmatpush2.msra.mxu0 0.0
    %582 = vmatprep.subr.mxu0 0.0
    %583 = vmatpush2.msra.mxu0 0.0
    %584 = vmatprep.subr.mxu0 0.0
    %585 = vmatpush2.msra.mxu0 0.0
    %586 = vmatprep.subr.mxu0 0.0
    %587 = vmatpush2.msra.mxu0 0.0
    %588 = vmatprep.subr.mxu0 0.0
    %589 = vmatpush2.msra.mxu0 0.0
    %590 = vmatprep.subr.mxu0 0.0
    %591 = vmatpush2.msra.mxu0 0.0
    %592 = vmatprep.subr.mxu0 0.0
    %593 = vmatpush2.msra.mxu0 0.0
    %594 = vmatprep.subr.mxu0 0.0
    %595 = vmatpush2.msra.mxu0 0.0
    %596 = vmatprep.mubr.f32.mxu0 0.0
    %597 = vmatmul.mubr.f32.gmra.mxu0 %v390
    %v598 = vpop.f32.mrf.mxu0
    %v599 = vadd.f32 0.0, %v598
    %v600 = vpop.f32.mrf.mxu0
    %601 = vdwg.mxu0
    %602 = vmatprep.subr.mxu0 0.0
    %603 = vmatpush1.msra.mxu0 0.0
    %604 = vmatprep.subr.mxu0 0.0
    %605 = vmatpush1.msra.mxu0 0.0
    %606 = vmatprep.subr.mxu0 0.0
    %607 = vmatpush1.msra.mxu0 0.0
    %608 = vmatprep.subr.mxu0 0.0
    %609 = vmatpush1.msra.mxu0 0.0
    %610 = vmatprep.subr.mxu0 0.0
    %611 = vmatpush1.msra.mxu0 0.0
    %612 = vmatprep.subr.mxu0 0.0
    %613 = vmatpush1.msra.mxu0 0.0
    %614 = vmatprep.subr.mxu0 0.0
    %615 = vmatpush1.msra.mxu0 0.0
    %616 = vmatprep.subr.mxu0 0.0
    %617 = vmatpush1.msra.mxu0 0.0
    %618 = vmatprep.subr.mxu0 0.0
    %619 = vmatpush1.msra.mxu0 0.0
    %620 = vmatprep.subr.mxu0 0.0
    %621 = vmatpush1.msra.mxu0 0.0
    %622 = vmatprep.subr.mxu0 0.0
    %623 = vmatpush1.msra.mxu0 0.0
    %624 = vmatprep.subr.mxu0 0.0
    %625 = vmatpush1.msra.mxu0 0.0
    %626 = vmatprep.subr.mxu0 0.0
    %627 = vmatpush1.msra.mxu0 0.0
    %628 = vmatprep.subr.mxu0 0.0
    %629 = vmatpush1.msra.mxu0 0.0
    %630 = vmatprep.subr.mxu0 0.0
    %631 = vmatpush1.msra.mxu0 %v386
    %632 = vmatprep.subr.mxu0 0.0
    %633 = vmatpush1.msra.mxu0 %v381
    %634 = vmatprep.subr.mxu0 0.0
    %635 = vmatpush2.msra.mxu0 0.0
    %636 = vmatprep.subr.mxu0 0.0
    %637 = vmatpush2.msra.mxu0 0.0
    %638 = vmatprep.subr.mxu0 0.0
    %639 = vmatpush2.msra.mxu0 0.0
    %640 = vmatprep.subr.mxu0 0.0
    %641 = vmatpush2.msra.mxu0 0.0
    %642 = vmatprep.subr.mxu0 0.0
    %643 = vmatpush2.msra.mxu0 0.0
    %644 = vmatprep.subr.mxu0 0.0
    %645 = vmatpush2.msra.mxu0 0.0
    %646 = vmatprep.subr.mxu0 0.0
    %647 = vmatpush2.msra.mxu0 0.0
    %648 = vmatprep.subr.mxu0 0.0
    %649 = vmatpush2.msra.mxu0 0.0
    %650 = vmatprep.subr.mxu0 0.0
    %651 = vmatpush2.msra.mxu0 0.0
    %652 = vmatprep.subr.mxu0 0.0
    %653 = vmatpush2.msra.mxu0 0.0
    %654 = vmatprep.subr.mxu0 0.0
    %655 = vmatpush2.msra.mxu0 0.0
    %656 = vmatprep.subr.mxu0 0.0
    %657 = vmatpush2.msra.mxu0 0.0
    %658 = vmatprep.subr.mxu0 0.0
    %659 = vmatpush2.msra.mxu0 0.0
    %660 = vmatprep.subr.mxu0 0.0
    %661 = vmatpush2.msra.mxu0 0.0
    %662 = vmatprep.subr.mxu0 0.0
    %663 = vmatpush2.msra.mxu0 0.0
    %664 = vmatprep.subr.mxu0 0.0
    %665 = vmatpush2.msra.mxu0 0.0
    %666 = vmatprep.mubr.f32.mxu0 0.0
    %667 = vmatmul.mubr.f32.gmra.mxu0 %v390
    %v668 = vpop.f32.mrf.mxu0
    %v669 = vadd.f32 0.0, %v668
    %v670 = vpop.f32.mrf.mxu0
    %671 = vdwg.mxu0
    %vm672 = vcmask 55296
    %673 = vst.msk [vmem:[%s3] sm:$0x7f] %vm672, %v459
    %674 = vst.msk [vmem:[%s3 + $0x8] sm:$0x7f] %vm672, %v529
    %675 = vst.msk [vmem:[%s3 + $0x10] sm:$0x7f] %vm672, %v599
    %676 = vst.msk [vmem:[%s3 + $0x18] sm:$0x7f] %vm672, %v669
    // Predicated region
    $region26: #{data_processor_forward.1} parent=1 // pred_check
      _
    $region27: #{data_processor_forward.1} parent=1 // pred_check_branch
      %678 = sbr.rel (0) target = $region29
    $region28: #{data_processor_forward.1} parent=1 // pred_region
      _
    $region29: #{data_processor_forward.1} parent=1 // pred_fallthru
      _
    // Predicated region
    $region30: #{data_processor_forward.1} parent=1 // pred_check
      _
    $region31: #{data_processor_forward.1} parent=1 // pred_check_branch
      %680 = sbr.rel (0) target = $region33
    $region32: #{data_processor_forward.1} parent=1 // pred_region
      _
    $region33: #{data_processor_forward.1} parent=1 // pred_fallthru
      _
    %681 = vsyncpa [#allocation3], 1
    %682 = vsyncpa [#allocation5], 1

</llo_original>
